<compile_context>
chip_gen: v6e
topology: v6e:2x2x1
jax: 0.10.0
libtpu: 0.0.40
codegen_flags: <defaults>
</compile_context>

<pallas_src>
import functools

import jax
import jax.numpy as jnp
import numpy as np
from jax.experimental import pallas as pl
from jax.experimental.pallas import tpu as pltpu

_LANE = 128


def _dice_sums_kernel(p1_ref, p2_ref, t_ref, out_ref):
    # out block (8, 128): lane-partial sums, one quantity per sublane row:
    #   0: sum(p1*m1)  1: sum(p1^2)  2: sum(m1)
    #   3: sum(p2*m2)  4: sum(p2^2)  5: sum(m2)   6,7: unused (zero)
    @pl.when(pl.program_id(1) == 0)
    def _():
        out_ref[...] = jnp.zeros_like(out_ref)

    p1 = p1_ref[...].astype(jnp.float32)
    p2 = p2_ref[...].astype(jnp.float32)
    t = t_ref[...]                        # native (integer) label dtype

    m1 = (t == 1).astype(jnp.float32)     # target_copy channel 0 (class 1)
    m2 = (t == 2).astype(jnp.float32)     # target_copy channel 1 (class 2)

    def rsum(x):                          # sublane reduction only -> (1, 128)
        return jnp.sum(x, axis=0, keepdims=True)

    partial = jnp.concatenate(
        [rsum(p1 * m1), rsum(p1 * p1), rsum(m1),
         rsum(p2 * m2), rsum(p2 * p2), rsum(m2),
         jnp.zeros((2, _LANE), jnp.float32)],
        axis=0)                           # (8, 128): one full-width vreg store
    out_ref[...] += partial


def _ch1_map(b, k):
    return (b, 1, k, 0)


def _ch2_map(b, k):
    return (b, 2, k, 0)


def _tgt_map(b, k):
    return (b, k, 0)


def _out_map(b, k):
    return (b, 0, 0)


def _choose_rows(R, target_rows=2048):
    """Rows of 128 lanes per grid step (~1 MiB per input stream per step)."""
    if R <= target_rows:
        return R
    best = None
    tr = 8
    while tr <= target_rows:
        if R % tr == 0:
            best = tr
        tr += 8
    return best if best is not None else R   # rare fallback: full extent


@functools.partial(jax.jit, static_argnums=2)
def dice_loss_23(pred, target, EE):
    """pred: (B, 4, D, size, size) float; target: (B, D, size, size) labels 0..4."""
    size = 4 * 2 ** (EE - 1)
    classnum = 4
    B, C = pred.shape[0], pred.shape[1]
    assert C == classnum and pred.shape[-1] == size and pred.shape[-2] == size
    N = int(np.prod(pred.shape[2:]))

    if N % _LANE != 0:
        # Tiny-spatial fallback: pad the flattened spatial axis with zeros
        # (label 0 -> both masks 0; pred 0 -> no contribution to any sum).
        Np = ((N + _LANE - 1) // _LANE) * _LANE
        pred_f = jnp.pad(pred.reshape(B, C, N), ((0, 0), (0, 0), (0, Np - N)))
        tgt_f = jnp.pad(target.reshape(B, N), ((0, 0), (0, Np - N)))
        N = Np
    else:
        pred_f = pred.reshape(B, C, N)
        tgt_f = target.reshape(B, N)

    R = N // _LANE
    pred_r = pred_f.reshape(B, C, R, _LANE)   # metadata-only reshape
    tgt_r = tgt_f.reshape(B, R, _LANE)

    TR = _choose_rows(R)
    grid = (B, R // TR)

    p_block = (pl.Squeezed(), pl.Squeezed(), TR, _LANE)
    sums = pl.pallas_call(
        _dice_sums_kernel,
        out_shape=jax.ShapeDtypeStruct((B, 8, _LANE), jnp.float32),
        grid_spec=pltpu.PrefetchScalarGridSpec(
            num_scalar_prefetch=0,
            grid=grid,
            in_specs=[
                pl.BlockSpec(p_block, _ch1_map),               # pred channel 1
                pl.BlockSpec(p_block, _ch2_map),               # pred channel 2
                pl.BlockSpec((pl.Squeezed(), TR, _LANE), _tgt_map),
            ],
            out_specs=pl.BlockSpec((pl.Squeezed(), 8, _LANE), _out_map),
        ),
        compiler_params=pltpu.CompilerParams(
            dimension_semantics=("parallel", "arbitrary"),
            vmem_limit_bytes=32 * 1024 * 1024),
    )(pred_r, pred_r, tgt_r)

    tot = jnp.sum(sums, axis=-1)              # (B, 8): final lane reduction
    s1, p1sq, c1 = tot[:, 0], tot[:, 1], tot[:, 2]
    s2, p2sq, c2 = tot[:, 3], tot[:, 4], tot[:, 5]

    dice_L = 2.0 * s1 / (p1sq + c1 + 1e-10)
    dice_T = (2.0 * s2 + 1e-10) / (p2sq + c2 + 1e-10)
    dice = (0.2 * dice_L + 1.8 * dice_T) / classnum
    loss = jnp.mean(1.0 - dice)
    return loss, jnp.mean(dice_L), jnp.mean(dice_T)


def _reference(pred, target):
    """Pure-JAX reference of the (intended) PyTorch semantics."""
    m1 = (target == 1).astype(jnp.float32)
    m2 = (target == 2).astype(jnp.float32)
    p1 = pred[:, 1]
    p2 = pred[:, 2]
    red = lambda x: jnp.sum(x, axis=(1, 2, 3))
    dice_L = 2.0 * red(p1 * m1) / (red(p1 * p1) + red(m1 * m1) + 1e-10)
    dice_T = (2.0 * red(p2 * m2) + 1e-10) / (red(p2 * p2) + red(m2 * m2) + 1e-10)
    dice = (0.2 * dice_L + 1.8 * dice_T) / 4.0
    return jnp.mean(1.0 - dice), jnp.mean(dice_L), jnp.mean(dice_T)


if __name__ == "__main__":
    key = jax.random.PRNGKey(0)
    EE = 3                       # size = 4 * 2**(EE-1) = 16
    B, C, D, size = 2, 4, 4, 16

    kp, kt = jax.random.split(key)
    pred = jax.nn.softmax(
        jax.random.normal(kp, (B, C, D, size, size), dtype=jnp.float32), axis=1)
    target = jax.random.randint(kt, (B, D, size, size), 0, 5, dtype=jnp.int32)

    loss, dl, dt = dice_loss_23(pred, target, EE)
    jax.block_until_ready(loss)

    ref_loss, ref_dl, ref_dt = _reference(pred, target)
    np.testing.assert_allclose(np.asarray(loss), np.asarray(ref_loss), rtol=1e-5, atol=1e-6)
    np.testing.assert_allclose(np.asarray(dl), np.asarray(ref_dl), rtol=1e-5, atol=1e-6)
    np.testing.assert_allclose(np.asarray(dt), np.asarray(ref_dt), rtol=1e-5, atol=1e-6)

    print("KERNEL_OK")
</pallas_src>

<mosaic_0001>
module attributes {stable_mosaic.version = 11 : i64} {
  func.func @_dice_sums_kernel(%arg0: i32, %arg1: i32, %arg2: memref<1x1x8x128xf32, #tpu.memory_space<vmem>>, %arg3: memref<1x1x8x128xf32, #tpu.memory_space<vmem>>, %arg4: memref<1x8x128xi32, #tpu.memory_space<vmem>>, %arg5: memref<1x8x128xf32, #tpu.memory_space<vmem>>) attributes {dimension_semantics = [#tpu.dimension_semantics<parallel>, #tpu.dimension_semantics<arbitrary>], iteration_bounds = array<i64: 2, 1>, scalar_prefetch = 0 : i64, scratch_operands = 0 : i64, tpu.core_type = #tpu.core_type<tc>, window_params = [{transform_indices = @transform_0, window_bounds = array<i64: 1, 1, 8, 128>}, {transform_indices = @transform_1, window_bounds = array<i64: 1, 1, 8, 128>}, {transform_indices = @transform_2, window_bounds = array<i64: 1, 8, 128>}, {transform_indices = @transform_3, window_bounds = array<i64: 1, 8, 128>}]} {
    %c0_i32 = arith.constant 0 : i32
    %0 = arith.cmpi eq, %arg1, %c0_i32 : i32
    %1 = arith.extui %0 : i1 to i32
    %c0_i32_0 = arith.constant 0 : i32
    %2 = arith.cmpi ne, %1, %c0_i32_0 : i32
    scf.if %2 {
      %cst_23 = arith.constant 0.000000e+00 : f32
      %41 = vector.broadcast %cst_23 : f32 to vector<8x128xf32>
      %c0_24 = arith.constant 0 : index
      %c0_25 = arith.constant 0 : index
      %c0_26 = arith.constant 0 : index
      %42 = vector.load %arg5[%c0_24, %c0_25, %c0_26] : memref<1x8x128xf32, #tpu.memory_space<vmem>>, vector<1x8x128xf32>
      %43 = vector.shape_cast %42 : vector<1x8x128xf32> to vector<8x128xf32>
      %44 = vector.shape_cast %41 : vector<8x128xf32> to vector<1x8x128xf32>
      tpu.vector_store %arg5[%c0_24, %c0_25, %c0_26], %44 {strides = array<i32>} : memref<1x8x128xf32, #tpu.memory_space<vmem>>, vector<1x8x128xf32>,
    } else {
    }
    %c0 = arith.constant 0 : index
    %c0_1 = arith.constant 0 : index
    %c0_2 = arith.constant 0 : index
    %c0_3 = arith.constant 0 : index
    %3 = vector.load %arg2[%c0, %c0_1, %c0_2, %c0_3] : memref<1x1x8x128xf32, #tpu.memory_space<vmem>>, vector<1x1x8x128xf32>
    %4 = vector.shape_cast %3 : vector<1x1x8x128xf32> to vector<8x128xf32>
    %c0_4 = arith.constant 0 : index
    %c0_5 = arith.constant 0 : index
    %c0_6 = arith.constant 0 : index
    %c0_7 = arith.constant 0 : index
    %5 = vector.load %arg3[%c0_4, %c0_5, %c0_6, %c0_7] : memref<1x1x8x128xf32, #tpu.memory_space<vmem>>, vector<1x1x8x128xf32>
    %6 = vector.shape_cast %5 : vector<1x1x8x128xf32> to vector<8x128xf32>
    %c0_8 = arith.constant 0 : index
    %c0_9 = arith.constant 0 : index
    %c0_10 = arith.constant 0 : index
    %7 = vector.load %arg4[%c0_8, %c0_9, %c0_10] : memref<1x8x128xi32, #tpu.memory_space<vmem>>, vector<1x8x128xi32>
    %8 = vector.shape_cast %7 : vector<1x8x128xi32> to vector<8x128xi32>
    %c1_i32 = arith.constant 1 : i32
    %9 = vector.broadcast %c1_i32 : i32 to vector<8x128xi32>
    %10 = arith.cmpi eq, %8, %9 : vector<8x128xi32>
    %11 = arith.extui %10 : vector<8x128xi1> to vector<8x128xi32>
    %12 = arith.sitofp %11 : vector<8x128xi32> to vector<8x128xf32>
    %c2_i32 = arith.constant 2 : i32
    %13 = vector.broadcast %c2_i32 : i32 to vector<8x128xi32>
    %14 = arith.cmpi eq, %8, %13 : vector<8x128xi32>
    %15 = arith.extui %14 : vector<8x128xi1> to vector<8x128xi32>
    %16 = arith.sitofp %15 : vector<8x128xi32> to vector<8x128xf32>
    %17 = arith.mulf %4, %12 : vector<8x128xf32>
    %cst = arith.constant dense<0.000000e+00> : vector<128xf32>
    %18 = vector.multi_reduction <add>, %17, %cst [0] : vector<8x128xf32> to vector<128xf32>
    %19 = vector.shape_cast %18 : vector<128xf32> to vector<1x128xf32>
    %20 = arith.mulf %4, %4 : vector<8x128xf32>
    %cst_11 = arith.constant dense<0.000000e+00> : vector<128xf32>
    %21 = vector.multi_reduction <add>, %20, %cst_11 [0] : vector<8x128xf32> to vector<128xf32>
    %22 = vector.shape_cast %21 : vector<128xf32> to vector<1x128xf32>
    %cst_12 = arith.constant dense<0.000000e+00> : vector<128xf32>
    %23 = vector.multi_reduction <add>, %12, %cst_12 [0] : vector<8x128xf32> to vector<128xf32>
    %24 = vector.shape_cast %23 : vector<128xf32> to vector<1x128xf32>
    %25 = arith.mulf %6, %16 : vector<8x128xf32>
    %cst_13 = arith.constant dense<0.000000e+00> : vector<128xf32>
    %26 = vector.multi_reduction <add>, %25, %cst_13 [0] : vector<8x128xf32> to vector<128xf32>
    %27 = vector.shape_cast %26 : vector<128xf32> to vector<1x128xf32>
    %28 = arith.mulf %6, %6 : vector<8x128xf32>
    %cst_14 = arith.constant dense<0.000000e+00> : vector<128xf32>
    %29 = vector.multi_reduction <add>, %28, %cst_14 [0] : vector<8x128xf32> to vector<128xf32>
    %30 = vector.shape_cast %29 : vector<128xf32> to vector<1x128xf32>
    %cst_15 = arith.constant dense<0.000000e+00> : vector<128xf32>
    %31 = vector.multi_reduction <add>, %16, %cst_15 [0] : vector<8x128xf32> to vector<128xf32>
    %32 = vector.shape_cast %31 : vector<128xf32> to vector<1x128xf32>
    %cst_16 = arith.constant 0.000000e+00 : f32
    %33 = vector.broadcast %cst_16 : f32 to vector<2x128xf32>
    %34 = tpu.concatenate %19, %22, %24, %27, %30, %32, %33 in 0 : vector<1x128xf32>, vector<1x128xf32>, vector<1x128xf32>, vector<1x128xf32>, vector<1x128xf32>, vector<1x128xf32>, vector<2x128xf32> -> vector<8x128xf32>
    %c0_17 = arith.constant 0 : index
    %c0_18 = arith.constant 0 : index
    %c0_19 = arith.constant 0 : index
    %35 = vector.load %arg5[%c0_17, %c0_18, %c0_19] : memref<1x8x128xf32, #tpu.memory_space<vmem>>, vector<1x8x128xf32>
    %36 = vector.shape_cast %35 : vector<1x8x128xf32> to vector<8x128xf32>
    %37 = arith.addf %36, %34 : vector<8x128xf32>
    %c0_20 = arith.constant 0 : index
    %c0_21 = arith.constant 0 : index
    %c0_22 = arith.constant 0 : index
    %38 = vector.load %arg5[%c0_20, %c0_21, %c0_22] : memref<1x8x128xf32, #tpu.memory_space<vmem>>, vector<1x8x128xf32>
    %39 = vector.shape_cast %38 : vector<1x8x128xf32> to vector<8x128xf32>
    %40 = vector.shape_cast %37 : vector<8x128xf32> to vector<1x8x128xf32>
    tpu.vector_store %arg5[%c0_20, %c0_21, %c0_22], %40 {strides = array<i32>} : memref<1x8x128xf32, #tpu.memory_space<vmem>>, vector<1x8x128xf32>,
    return
  }
  func.func @transform_0(%arg0: i32, %arg1: i32) -> (i32, i32, i32, i32) {
    %c1_i32 = arith.constant 1 : i32
    %c0_i32 = arith.constant 0 : i32
    %c0_i32_0 = arith.constant 0 : i32
    return %arg0, %c1_i32, %arg1, %c0_i32 : i32, i32, i32, i32
  }
  func.func @transform_1(%arg0: i32, %arg1: i32) -> (i32, i32, i32, i32) {
    %c2_i32 = arith.constant 2 : i32
    %c0_i32 = arith.constant 0 : i32
    %c0_i32_0 = arith.constant 0 : i32
    return %arg0, %c2_i32, %arg1, %c0_i32 : i32, i32, i32, i32
  }
  func.func @transform_2(%arg0: i32, %arg1: i32) -> (i32, i32, i32) {
    %c0_i32 = arith.constant 0 : i32
    %c0_i32_0 = arith.constant 0 : i32
    return %arg0, %arg1, %c0_i32 : i32, i32, i32
  }
  func.func @transform_3(%arg0: i32, %arg1: i32) -> (i32, i32, i32) {
    %c0_i32 = arith.constant 0 : i32
    %c0_i32_0 = arith.constant 0 : i32
    %c0_i32_1 = arith.constant 0 : i32
    return %arg0, %c0_i32, %c0_i32_0 : i32, i32, i32
  }
}

</mosaic_0001>

<llo_original>
// kernel: dice_loss_23.1
$region0: #{dice_loss_23.1}
  #allocation0 [shape = 'u32[]', space=smem, size = 0x4, offset = 0x4, fixed_abs, tag = 'smem constant byte address 0x4 - core index']
  #allocation1 [shape = 'u32[144,128]{1,0:T(1,128)}', space=vmem, size = 0x12000, scoped, tag = 'internal scratch']
  %s0 = inlined_call_operand.vmem [shape: f32[2,4,8,128], index: 0, kind: input, shape index: {}, may-alias: {0,1}]
  %s1 = inlined_call_operand.vmem [shape: f32[2,4,8,128], index: 1, kind: input, shape index: {}, may-alias: {0,1}]
  %s2 = inlined_call_operand.vmem [shape: s32[2,8,128], index: 2, kind: input, shape index: {}]
  %s3 = inlined_call_operand.vmem [shape: f32[2,8,128], index: 3, kind: output, shape index: {}]
  %s4 = sld [smem:[#allocation0]]
  $region49: #{dice_loss_23.1} parent=0
    _
  %s6 = ssub.s32 1, %s4
  %s7 = scalar_select 0, %s6, %s4
  loop: start=0, step=1, limit=4
  $region2: #{dice_loss_23.1} parent=0 // loop_pre_header
    _
  $region3: #{dice_loss_23.1} parent=0 // loop_header
    %s9 = sphi 0, %s13
    %p10 = scmp.ge.s32.totalorder %s9, 4
    %s16 = sphi 0, %s28
    %s17 = sphi 0, %s24
    %s18 = sphi 0, %s16
    %s19 = sphi 0, %s17
    %s20 = sphi 0, %s18
    %s21 = sphi 0, %s19
    %s33 = sphi 0, %s35
    %s36 = sphi 0, %s33
    %s37 = sphi 0, %s36
    %s53 = sphi 0, %s37
    %s61 = sphi 0, %s63
    %s64 = sphi 0, %s61
    %s65 = sphi 0, %s64
    %s81 = sphi 0, %s65
    %s89 = sphi 0, %s91
    %s92 = sphi 0, %s89
    %s93 = sphi 0, %s92
    %s109 = sphi 0, %s93
    %s115 = sphi 0, %s117
    %s118 = sphi 0, %s115
    %s119 = sphi 0, %s118
    %s135 = sphi 0, %s119
  $region4: #{dice_loss_23.1} parent=0 // loop_header_branch
    %12 = sbr.rel (%p10) target = $region8
  $region5: #{dice_loss_23.1} parent=0 // loop_body
    %s14 = ssub.s32 %s9, 1
    %s15 = ssub.s32 %s9, 2
    %s22 = sadd.s32 1, %s17
    %p23 = scmp.ge.s32.totalorder %s22, 1
    %s24 = scalar_select %p23, 0, %s22
    %s25 = sadd.s32 1, %s16
    %s26 = scalar_select %p23, %s25, %s16
    %p27 = scmp.ge.s32.totalorder %s26, 2
    %s28 = scalar_select %p27, 0, %s26
    %s29 = ssub.s32 %s16, %s28
    %s30 = ssub.s32 %s17, %s24
    %s31 = sor.u32 %s29, %s30
    %p32 = scmp.eq.s32.totalorder %s31, 0
    %s34 = sadd.s32 %s33, 1
    %s35 = scalar_select %p32, %s33, %s34
    %p38 = pneg %p32
    %p39 = scmp.eq.s32.totalorder %s9, 1
    %p40 = por %p38, %p39
    %p41 = scmp.ne.s32.totalorder %s33, %s36
    %p42 = scmp.eq.s32.totalorder %s9, 0
    %p43 = por %p41, %p42
    %p44 = scmp.ne.s32.totalorder %s33, %s36
    %p45 = scmp.eq.s32.totalorder %s14, 1
    %p46 = por %p44, %p45
    %p47 = scmp.ne.s32.totalorder %s36, %s37
    %p48 = scmp.eq.s32.totalorder %s14, 0
    %p49 = por %p47, %p48
    %p50 = scmp.ne.s32.totalorder %s36, %s37
    %p51 = scmp.eq.s32.totalorder %s15, 1
    %p52 = por %p50, %p51
    %p54 = scmp.ne.s32.totalorder %s37, %s53
    %p55 = scmp.eq.s32.totalorder %s15, 0
    %p56 = por %p54, %p55
    %s57 = ssub.s32 %s16, %s28
    %s58 = ssub.s32 %s17, %s24
    %s59 = sor.u32 %s57, %s58
    %p60 = scmp.eq.s32.totalorder %s59, 0
    %s62 = sadd.s32 %s61, 1
    %s63 = scalar_select %p60, %s61, %s62
    %p66 = pneg %p60
    %p67 = scmp.eq.s32.totalorder %s9, 1
    %p68 = por %p66, %p67
    %p69 = scmp.ne.s32.totalorder %s61, %s64
    %p70 = scmp.eq.s32.totalorder %s9, 0
    %p71 = por %p69, %p70
    %p72 = scmp.ne.s32.totalorder %s61, %s64
    %p73 = scmp.eq.s32.totalorder %s14, 1
    %p74 = por %p72, %p73
    %p75 = scmp.ne.s32.totalorder %s64, %s65
    %p76 = scmp.eq.s32.totalorder %s14, 0
    %p77 = por %p75, %p76
    %p78 = scmp.ne.s32.totalorder %s64, %s65
    %p79 = scmp.eq.s32.totalorder %s15, 1
    %p80 = por %p78, %p79
    %p82 = scmp.ne.s32.totalorder %s65, %s81
    %p83 = scmp.eq.s32.totalorder %s15, 0
    %p84 = por %p82, %p83
    %s85 = ssub.s32 %s16, %s28
    %s86 = ssub.s32 %s17, %s24
    %s87 = sor.u32 %s85, %s86
    %p88 = scmp.eq.s32.totalorder %s87, 0
    %s90 = sadd.s32 %s89, 1
    %s91 = scalar_select %p88, %s89, %s90
    %p94 = pneg %p88
    %p95 = scmp.eq.s32.totalorder %s9, 1
    %p96 = por %p94, %p95
    %p97 = scmp.ne.s32.totalorder %s89, %s92
    %p98 = scmp.eq.s32.totalorder %s9, 0
    %p99 = por %p97, %p98
    %p100 = scmp.ne.s32.totalorder %s89, %s92
    %p101 = scmp.eq.s32.totalorder %s14, 1
    %p102 = por %p100, %p101
    %p103 = scmp.ne.s32.totalorder %s92, %s93
    %p104 = scmp.eq.s32.totalorder %s14, 0
    %p105 = por %p103, %p104
    %p106 = scmp.ne.s32.totalorder %s92, %s93
    %p107 = scmp.eq.s32.totalorder %s15, 1
    %p108 = por %p106, %p107
    %p110 = scmp.ne.s32.totalorder %s93, %s109
    %p111 = scmp.eq.s32.totalorder %s15, 0
    %p112 = por %p110, %p111
    %s113 = ssub.s32 %s16, %s28
    %p114 = scmp.eq.s32.totalorder %s113, 0
    %s116 = sadd.s32 %s115, 1
    %s117 = scalar_select %p114, %s115, %s116
    %p120 = pneg %p114
    %p121 = scmp.eq.s32.totalorder %s9, 1
    %p122 = por %p120, %p121
    %p123 = scmp.ne.s32.totalorder %s115, %s118
    %p124 = scmp.eq.s32.totalorder %s9, 0
    %p125 = por %p123, %p124
    %p126 = scmp.ne.s32.totalorder %s115, %s118
    %p127 = scmp.eq.s32.totalorder %s14, 1
    %p128 = por %p126, %p127
    %p129 = scmp.ne.s32.totalorder %s118, %s119
    %p130 = scmp.eq.s32.totalorder %s14, 0
    %p131 = por %p129, %p130
    %p132 = scmp.ne.s32.totalorder %s118, %s119
    %p133 = scmp.eq.s32.totalorder %s15, 1
    %p134 = por %p132, %p133
    %p136 = scmp.ne.s32.totalorder %s119, %s135
    %p137 = scmp.eq.s32.totalorder %s15, 0
    %p138 = por %p136, %p137
    %p139 = scmp.le.s32.totalorder 1, %s9
    %p140 = scmp.lt.s32.totalorder %s9, 3
    %p141 = pnand %p139, %p140
    %p142 = pneg %p141
    // Predicated region
    $region9: #{dice_loss_23.1} parent=5 // pred_check
      _
    $region10: #{dice_loss_23.1} parent=5 // pred_check_branch
      %144 = sbr.rel (%p141) target = $region12
    $region11: #{dice_loss_23.1} parent=5 // pred_region
      %s145 = ssub.s32 %s9, 1
    $region12: #{dice_loss_23.1} parent=5 // pred_fallthru
      _
    %p146 = scmp.lt.s32.totalorder %s9, 2
    // Predicated region
    $region13: #{dice_loss_23.1} parent=5 // pred_check
      %p147 = pneg %p146
    $region14: #{dice_loss_23.1} parent=5 // pred_check_branch
      %149 = sbr.rel (%p147) target = $region16
    $region15: #{dice_loss_23.1} parent=5 // pred_region
      // Predicated region
      $region17: #{dice_loss_23.1} parent=15 // pred_check
        %p150 = pneg %p43
      $region18: #{dice_loss_23.1} parent=15 // pred_check_branch
        %152 = sbr.rel (%p150) target = $region20
      $region19: #{dice_loss_23.1} parent=15 // pred_region
        %p153 = scmp.lt.s32.totalorder %s16, 1
        %s154 = scalar_select %p153, %s16, 1
        %p155 = scmp.lt.s32.totalorder %s17, 0
        %s156 = scalar_select %p155, %s17, 0
        %s157 = sadd.s32 %s156, 1
        %s158 = smul.addr %s154, 4
        %s159 = sadd.s32 %s157, %s158
        %s160 = smul.addr %s159, 8
        %s161 = scalar_lea.vmem %s0, %s160
      $region20: #{dice_loss_23.1} parent=15 // pred_fallthru
        _
      // Predicated region
      $region21: #{dice_loss_23.1} parent=15 // pred_check
        %p162 = pneg %p71
      $region22: #{dice_loss_23.1} parent=15 // pred_check_branch
        %164 = sbr.rel (%p162) target = $region24
      $region23: #{dice_loss_23.1} parent=15 // pred_region
        %p165 = scmp.lt.s32.totalorder %s16, 1
        %s166 = scalar_select %p165, %s16, 1
        %p167 = scmp.lt.s32.totalorder %s17, 0
        %s168 = scalar_select %p167, %s17, 0
        %s169 = sadd.s32 %s168, 2
        %s170 = smul.addr %s166, 4
        %s171 = sadd.s32 %s169, %s170
        %s172 = smul.addr %s171, 8
        %s173 = scalar_lea.vmem %s1, %s172
      $region24: #{dice_loss_23.1} parent=15 // pred_fallthru
        _
      // Predicated region
      $region25: #{dice_loss_23.1} parent=15 // pred_check
        %p174 = pneg %p99
      $region26: #{dice_loss_23.1} parent=15 // pred_check_branch
        %176 = sbr.rel (%p174) target = $region28
      $region27: #{dice_loss_23.1} parent=15 // pred_region
        %p177 = scmp.lt.s32.totalorder %s16, 1
        %s178 = scalar_select %p177, %s16, 1
        %p179 = scmp.lt.s32.totalorder %s17, 0
        %s180 = scalar_select %p179, %s17, 0
        %s181 = sadd.s32 %s180, %s178
        %s182 = smul.addr %s181, 8
        %s183 = scalar_lea.vmem %s2, %s182
      $region28: #{dice_loss_23.1} parent=15 // pred_fallthru
        _
    $region16: #{dice_loss_23.1} parent=5 // pred_fallthru
      _
    %p184 = scmp.le.s32.totalorder 1, %s9
    %p185 = scmp.lt.s32.totalorder %s9, 3
    %p186 = pnand %p184, %p185
    %p187 = pneg %p186
    // Predicated region
    $region29: #{dice_loss_23.1} parent=5 // pred_check
      _
    $region30: #{dice_loss_23.1} parent=5 // pred_check_branch
      %189 = sbr.rel (%p186) target = $region32
    $region31: #{dice_loss_23.1} parent=5 // pred_region
      %s190 = ssub.s32 %s9, 1
      %p191 = scmp.lt.s32.totalorder %s18, 1
      %s192 = scalar_select %p191, %s18, 1
      %p193 = scmp.lt.s32.totalorder %s19, 0
      %s194 = scalar_select %p193, %s19, 0
      %s195 = sadd.s32 %s194, 1
      %s196 = smul.addr %s192, 4
      %s197 = sadd.s32 %s195, %s196
      %s198 = smul.addr %s197, 8
      %s199 = scalar_lea.vmem %s0, %s198
      %p200 = pneg %p49
      %p201 = pneg %p46
      %p202 = scmp.lt.s32.totalorder %s18, 1
      %s203 = scalar_select %p202, %s18, 1
      %p204 = scmp.lt.s32.totalorder %s19, 0
      %s205 = scalar_select %p204, %s19, 0
      %s206 = sadd.s32 %s205, 2
      %s207 = smul.addr %s203, 4
      %s208 = sadd.s32 %s206, %s207
      %s209 = smul.addr %s208, 8
      %s210 = scalar_lea.vmem %s1, %s209
      %p211 = pneg %p77
      %p212 = pneg %p74
      %p213 = scmp.lt.s32.totalorder %s18, 1
      %s214 = scalar_select %p213, %s18, 1
      %p215 = scmp.lt.s32.totalorder %s19, 0
      %s216 = scalar_select %p215, %s19, 0
      %s217 = sadd.s32 %s216, %s214
      %s218 = smul.addr %s217, 8
      %s219 = scalar_lea.vmem %s2, %s218
      %p220 = pneg %p105
      %p221 = pneg %p102
      %p222 = pneg %p131
      %p223 = pneg %p128
      %p224 = scmp.lt.s32.totalorder %s18, 1
      %s225 = scalar_select %p224, %s18, 1
      %s226 = smul.addr %s225, 8
      %s227 = scalar_lea.vmem %s3, %s226
      %p228 = scmp.lt.s32.totalorder %s18, 1
      %s229 = scalar_select %p228, %s18, 1
      %p230 = scmp.lt.s32.totalorder %s19, 0
      %s231 = scalar_select %p230, %s19, 0
      %s232 = sadd.s32 %s231, 1
      %s233 = smul.addr %s229, 4
      %s234 = sadd.s32 %s232, %s233
      %s235 = smul.addr %s234, 8
      %s236 = scalar_lea.vmem %s0, %s235
      %p237 = scmp.lt.s32.totalorder %s18, 1
      %s238 = scalar_select %p237, %s18, 1
      %p239 = scmp.lt.s32.totalorder %s19, 0
      %s240 = scalar_select %p239, %s19, 0
      %s241 = sadd.s32 %s240, 2
      %s242 = smul.addr %s238, 4
      %s243 = sadd.s32 %s241, %s242
      %s244 = smul.addr %s243, 8
      %s245 = scalar_lea.vmem %s1, %s244
      %p246 = scmp.lt.s32.totalorder %s18, 1
      %s247 = scalar_select %p246, %s18, 1
      %p248 = scmp.lt.s32.totalorder %s19, 0
      %s249 = scalar_select %p248, %s19, 0
      %s250 = sadd.s32 %s249, %s247
      %s251 = smul.addr %s250, 8
      %s252 = scalar_lea.vmem %s2, %s251
      %p253 = scmp.lt.s32.totalorder %s18, 1
      %s254 = scalar_select %p253, %s18, 1
      %s255 = smul.addr %s254, 8
      %s256 = scalar_lea.vmem %s3, %s255
      %p257 = scmp.eq.s32.totalorder %s19, 0
      // Predicated region
      $region33: #{dice_loss_23.1} parent=31 // pred_check
        %p258 = pneg %p257
      $region34: #{dice_loss_23.1} parent=31 // pred_check_branch
        %260 = sbr.rel (%p258) target = $region36
      $region35: #{dice_loss_23.1} parent=31 // pred_region
        %261 = vst [vmem:[%s256] sm:$0xff] 0.0
      $region36: #{dice_loss_23.1} parent=31 // pred_fallthru
        _
      %v262 = vld [vmem:[%s236] sm:$0xff]
      %v263 = vld [vmem:[%s245] sm:$0xff]
      %v264 = vld [vmem:[%s252] sm:$0xff]
      %vm265 = vcmp.eq.s32.totalorder %v264, 1
      %v266 = vsel %vm265, 1, 0
      %v267 = vcvt.s32.f32 %v266
      %vm268 = vcmp.eq.s32.totalorder %v264, 2
      %v269 = vsel %vm268, 1, 0
      %v270 = vcvt.s32.f32 %v269
      %v271 = vmul.f32 %v262, %v267
      %v272 = vrot.slane %v271, 4
      %v273 = vadd.f32 %v271, %v272
      %v274 = vrot.slane %v273, 2
      %v275 = vadd.f32 %v273, %v274
      %v276 = vrot.slane %v275, 1
      %v277 = vadd.f32 %v275, %v276
      %v278 = vmul.f32 %v262, %v262
      %v279 = vrot.slane %v278, 4
      %v280 = vadd.f32 %v278, %v279
      %v281 = vrot.slane %v280, 2
      %v282 = vadd.f32 %v280, %v281
      %v283 = vrot.slane %v282, 1
      %v284 = vadd.f32 %v282, %v283
      %v285 = vrot.slane %v267, 4
      %v286 = vadd.f32 %v267, %v285
      %v287 = vrot.slane %v286, 2
      %v288 = vadd.f32 %v286, %v287
      %v289 = vrot.slane %v288, 1
      %v290 = vadd.f32 %v288, %v289
      %v291 = vmul.f32 %v263, %v270
      %v292 = vrot.slane %v291, 4
      %v293 = vadd.f32 %v291, %v292
      %v294 = vrot.slane %v293, 2
      %v295 = vadd.f32 %v293, %v294
      %v296 = vrot.slane %v295, 1
      %v297 = vadd.f32 %v295, %v296
      %v298 = vmul.f32 %v263, %v263
      %v299 = vrot.slane %v298, 4
      %v300 = vadd.f32 %v298, %v299
      %v301 = vrot.slane %v300, 2
      %v302 = vadd.f32 %v300, %v301
      %v303 = vrot.slane %v302, 1
      %v304 = vadd.f32 %v302, %v303
      %v305 = vrot.slane %v270, 4
      %v306 = vadd.f32 %v270, %v305
      %v307 = vrot.slane %v306, 2
      %v308 = vadd.f32 %v306, %v307
      %v309 = vrot.slane %v308, 1
      %v310 = vadd.f32 %v308, %v309
      %vm311 = vcmask 1040384
      %v312 = vsel %vm311, %v277, %v284
      %vm313 = vcmask 1041408
      %v314 = vsel %vm313, %v312, %v290
      %vm315 = vcmask 1042432
      %v316 = vsel %vm315, %v314, %v297
      %vm317 = vcmask 1043456
      %v318 = vsel %vm317, %v316, %v304
      %vm319 = vcmask 1044480
      %v320 = vsel %vm319, %v318, %v310
      %vm321 = vcmask 1045504
      %v322 = vsel %vm321, %v320, 0.0
      %v323 = vld [vmem:[%s256] sm:$0xff]
      %v324 = vadd.f32 %v323, %v322
      %325 = vst [vmem:[%s256] sm:$0xff] %v324
      %p326 = scmp.lt.s32.totalorder %s18, 1
      %s327 = scalar_select %p326, %s18, 1
      %s328 = smul.addr %s327, 8
      %s329 = scalar_lea.vmem %s3, %s328
      // Predicated region
      $region37: #{dice_loss_23.1} parent=31 // pred_check
        %p330 = pneg %p128
      $region38: #{dice_loss_23.1} parent=31 // pred_check_branch
        %332 = sbr.rel (%p330) target = $region40
      $region39: #{dice_loss_23.1} parent=31 // pred_region
        _
      $region40: #{dice_loss_23.1} parent=31 // pred_fallthru
        _
    $region32: #{dice_loss_23.1} parent=5 // pred_fallthru
      _
    %p333 = scmp.le.s32.totalorder 2, %s9
    // Predicated region
    $region41: #{dice_loss_23.1} parent=5 // pred_check
      %p334 = pneg %p333
    $region42: #{dice_loss_23.1} parent=5 // pred_check_branch
      %336 = sbr.rel (%p334) target = $region44
    $region43: #{dice_loss_23.1} parent=5 // pred_region
      %s337 = ssub.s32 %s9, 2
      // Predicated region
      $region45: #{dice_loss_23.1} parent=43 // pred_check
        %p338 = pneg %p134
      $region46: #{dice_loss_23.1} parent=43 // pred_check_branch
        %340 = sbr.rel (%p338) target = $region48
      $region47: #{dice_loss_23.1} parent=43 // pred_region
        %p341 = scmp.lt.s32.totalorder %s20, 1
        %s342 = scalar_select %p341, %s20, 1
        %s343 = smul.addr %s342, 8
        %s344 = scalar_lea.vmem %s3, %s343
      $region48: #{dice_loss_23.1} parent=43 // pred_fallthru
        _
    $region44: #{dice_loss_23.1} parent=5 // pred_fallthru
      _
  $region6: #{dice_loss_23.1} parent=0 // loop_footer
    %s13 = sadd.s32 1, %s9
  $region7: #{dice_loss_23.1} parent=0 // loop_footer_branch
    %8 = sbr.rel target = $region3
  $region8: #{dice_loss_23.1} parent=0 // loop_exit
    _

</llo_original>
